<compile_context>
chip_gen: v6e
topology: v6e:2x2x1
jax: 0.10.0
libtpu: 0.0.40
codegen_flags: <defaults>
</compile_context>

<pallas_src>
import numpy as np
import jax
import jax.numpy as jnp
from jax import lax
from jax.experimental import pallas as pl
from jax.experimental.pallas import tpu as pltpu


_SMALL_X_BYTES_DEFAULT = 8 << 20      # below this, padding x in HBM is cheap


def _cdiv(a, b):
    return -(-a // b)


def _round_up(x, m):
    return ((x + m - 1) // m) * m


def _round_down(x, m):
    return (x // m) * m


def _vmem_info():
    """(physical VMEM bytes, usable budget) with a conservative fallback."""
    cap = None
    try:
        cap = getattr(pltpu.get_tpu_info(), "vmem_capacity_bytes", None)
    except Exception:
        cap = None
    if not cap or cap <= 0:
        cap = 64 << 20                          # assume v7x-class part if unknown
    budget = int(min(cap * 3 // 4, 100 << 20))  # v5e/v6e ~96-100 MiB, v7x ~48 MiB
    return int(cap), budget


def _vmem_estimate(tile_n, tile_f, block_e, x_item, out_item):
    out_blocks = 2 * tile_n * tile_f * out_item   # double-buffered output block
    acc = tile_n * tile_f * 4                     # f32 scratch accumulator
    x_blocks = 2 * block_e * tile_f * x_item      # double-buffered input slab
    idx_blocks = 2 * 8 * max(block_e, 128) * 4    # lane-dense idx row (padded)
    one_hot = tile_n * block_e * (4 + x_item)     # compare + cast temporaries
    dot_tmp = tile_n * tile_f * 4                 # matmul result
    return out_blocks + acc + x_blocks + idx_blocks + one_hot + dot_tmp


def _pick_tile_f(F):
    if F < 128:
        return max(F, 1)
    tile_f = 128
    for cand in (512, 384, 256, 128):
        if cand <= F:
            tile_f = cand
            break
    # v7x: the F axis is a "parallel" axis -- make sure there are at least two
    # F tiles so the second TensorCore is not idle (cheap on 1-TC parts).
    if F >= 256 and _cdiv(F, tile_f) == 1:
        tile_f = max(128, _round_up(F // 2, 128))
    return tile_f


def _fit_vmem(tile_n, tile_f, block_e, x_item, out_item, budget, can_shrink_n):
    """Shrink tiles until the estimated VMEM footprint fits the budget."""
    while _vmem_estimate(tile_n, tile_f, block_e, x_item, out_item) > budget:
        if tile_f > 256:
            tile_f = 256
        elif tile_f > 128:
            tile_f = 128
        elif block_e > 256:
            block_e = 256
        elif block_e > 128:
            block_e = 128
        elif can_shrink_n and tile_n > 128:
            tile_n = 128
        else:
            break
    return tile_n, tile_f, block_e


def _clamped_block(n, e, lo_ref, nb_ref):
    # Clamp the reduction step to the last E block this output tile actually
    # needs; consecutive equal block indices => the pipeline skips the re-fetch.
    return lo_ref[n] + jnp.minimum(e, jnp.maximum(nb_ref[n] - 1, 0))


def _make_scatter_kernel(tile_n, block_e, n_valid_rows, mask_tail, cdtype):
    """Grid = (output tiles [parallel], F tiles [parallel], E blocks [reduction])."""

    def kernel(lo_ref, nb_ref, idx_ref, x_ref, out_ref, acc_ref):
        n = pl.program_id(0)
        e = pl.program_id(2)

        @pl.when(e == 0)
        def _init():
            acc_ref[...] = jnp.zeros_like(acc_ref)

        # Skip E blocks that cannot contain rows for this output tile.
        @pl.when(e < nb_ref[n])
        def _accumulate():
            idx = idx_ref[...]                                     # (1, block_e)
            local = idx - n * tile_n
            one_hot = (local == lax.broadcasted_iota(
                jnp.int32, (tile_n, block_e), 0)).astype(cdtype)   # (tile_n, block_e)
            x = x_ref[...]                                         # (block_e, tile_f)
            if mask_tail:
                # Unpadded input: zero the garbage rows of the partial last
                # block (0 * NaN would otherwise poison the accumulator).
                blk = _clamped_block(n, e, lo_ref, nb_ref)
                rows = blk * block_e + lax.broadcasted_iota(
                    jnp.int32, (block_e, 1), 0)
                x = jnp.where(rows < n_valid_rows, x, jnp.zeros_like(x))
            # Canonical (M,K)@(K,N) on the MXU with f32 accumulation.
            acc_ref[...] += lax.dot_general(
                one_hot, x,
                dimension_numbers=(((1,), (0,)), ((), ())),
                preferred_element_type=jnp.float32)

        @pl.when(e == pl.num_programs(2) - 1)
        def _emit():
            out_ref[...] = acc_ref[...].astype(out_ref.dtype)

    return kernel


def scatter_sum_pallas(inp, index, dim, dim_size, *,
                       method="auto", sort_threshold=1024, block_e=512,
                       allow_bf16_inputs=False,
                       small_x_bytes=_SMALL_X_BYTES_DEFAULT):
    """torch_scatter.scatter_sum(input, index, dim, dim_size=dim_size) for a
    1-D `index` of length input.shape[dim].

    method: "auto" | "dense" | "sorted".  "sorted" tiles dim_size, sorts the
    indices on the host and skips E blocks an output tile never touches
    (near-linear work for large dim_size); "dense" is a single one-hot matmul
    over the full dim_size (best for small dim_size).
    """
    # TODO(synk): index broadcasting beyond a 1-D index (full torch_scatter
    #             broadcasting semantics) is not implemented.
    inp = jnp.asarray(inp)
    index = jnp.asarray(index).astype(jnp.int32).reshape(-1)
    dim_size = int(dim_size)
    orig_dtype = inp.dtype
    ndim = inp.ndim
    dim = dim % ndim

    x = jnp.moveaxis(inp, dim, 0)
    rest_shape = x.shape[1:]
    E = int(x.shape[0])
    F = int(np.prod(rest_shape)) if rest_shape else 1
    if index.shape[0] != E:
        raise ValueError("index must be 1-D with length input.shape[dim]")

    # Compute / output dtypes.  bf16 inputs stay bf16 on the MXU (f32
    # accumulation); f32 inputs may optionally be fed as bf16 (3-6x MXU
    # throughput) when the caller accepts bf16 rounding of x.
    if orig_dtype == jnp.bfloat16:
        cdtype = jnp.bfloat16
    elif orig_dtype == jnp.float32:
        cdtype = jnp.bfloat16 if allow_bf16_inputs else jnp.float32
    else:
        cdtype = jnp.float32
    is_float = jnp.issubdtype(orig_dtype, jnp.floating)
    out_dtype = orig_dtype if is_float else jnp.float32

    out_full_shape = (dim_size,) + rest_shape
    if E == 0 or F == 0 or dim_size == 0:
        out = jnp.moveaxis(jnp.zeros(out_full_shape, out_dtype), 0, dim)
        return out if is_float else out.astype(orig_dtype)

    x2 = x.reshape(E, F).astype(cdtype)
    x_item = jnp.dtype(cdtype).itemsize
    out_item = jnp.dtype(out_dtype).itemsize

    cap, budget = _vmem_info()
    block_e = max(128, _round_down(int(block_e), 128))
    use_sorted = (method == "sorted") or (method == "auto" and dim_size > sort_threshold)
    # TODO(synk): lower sort_threshold on v5e (197 TF/s makes the dense
    #             one-hot matmul ~4.7x more expensive than on v6e/v7x).
    small_x = (not use_sorted) and (E * F * x_item <= small_x_bytes)

    # Lane-dense F tiling; small inputs pad F to a multiple of 128 (cheap,
    # unmasked stores), large inputs run with a partial last F tile instead.
    F_work = _round_up(F, 128) if small_x else F
    tile_f = _pick_tile_f(F_work)

    mask_tail = False
    if use_sorted:
        # ---- dim_size-tiled, sorted-index variant (large dim_size) ---------
        tile_n = min(256, dim_size)
        be = block_e if E > block_e else max(8, _round_up(E, 8))
        tile_n, tile_f, be = _fit_vmem(tile_n, tile_f, be, x_item, out_item,
                                       budget, can_shrink_n=True)
        num_n = _cdiv(dim_size, tile_n)
        sentinel = num_n * tile_n

        # Host-side sort + segment boundaries (tiny arrays).  TODO(synk): the
        # sorted path is eager-only (host sync); jit callers use method="dense".
        idx_np = np.asarray(jax.device_get(index)).astype(np.int64)
        order = np.argsort(idx_np, kind="stable").astype(np.int32)
        idx_sorted = idx_np[order]

        E_pad = _round_up(E, be)
        order_pad = np.zeros((E_pad,), np.int32)
        order_pad[:E] = order                       # pad rows re-read row 0 ...
        idx_pad_np = np.full((E_pad,), sentinel, np.int32)
        idx_pad_np[:E] = idx_sorted                 # ... but never match a tile

        boundaries = np.arange(num_n + 1, dtype=np.int64) * tile_n
        pos = np.searchsorted(idx_sorted, boundaries, side="left")
        lo_el, hi_el = pos[:-1], pos[1:]
        total_blocks = E_pad // be
        lo_blk = np.minimum(lo_el // be, total_blocks - 1)
        nb = np.where(hi_el > lo_el, -(-hi_el // be) - lo_blk, 0)
        num_e = max(1, int(nb.max()))

        x_arr = jnp.take(x2, jnp.asarray(order_pad), axis=0)   # sorted + padded
        idx_arr = jnp.asarray(idx_pad_np).reshape(1, E_pad)
        lo_arr = jnp.asarray(lo_blk.astype(np.int32))
        nb_arr = jnp.asarray(nb.astype(np.int32))
    else:
        # ---- dense one-hot matmul over the full dim_size --------------------
        tile_n = dim_size
        num_n = 1
        sentinel = dim_size
        if small_x:
            be = block_e if E > block_e else max(8, _round_up(E, 8))
            tile_n, tile_f, be = _fit_vmem(tile_n, tile_f, be, x_item, out_item,
                                           budget, can_shrink_n=False)
            E_pad = _round_up(E, be)
            x_arr = jnp.pad(x2, ((0, E_pad - E), (0, F_work - F)))
            idx_pad = jnp.pad(index, (0, E_pad - E), constant_values=sentinel)
            num_e = E_pad // be
        else:
            # Large input: no HBM pad copy -- mask the E tail in-kernel.
            if E >= 128:
                be = min(block_e, max(128, _round_down(E, 128)))
            else:
                be = E        # single (ragged) block; rare: tiny E with huge F
            tile_n, tile_f, be = _fit_vmem(tile_n, tile_f, be, x_item, out_item,
                                           budget, can_shrink_n=False)
            x_arr = x2
            num_e = _cdiv(E, be)
            E_pad = num_e * be
            idx_pad = jnp.pad(index, (0, E_pad - E), constant_values=sentinel)
            mask_tail = (E % be) != 0
        idx_arr = idx_pad.reshape(1, E_pad)
        lo_arr = jnp.zeros((1,), jnp.int32)
        nb_arr = jnp.full((1,), num_e, jnp.int32)

    num_f = _cdiv(F_work, tile_f)
    grid = (num_n, num_f, num_e)
    est = _vmem_estimate(tile_n, tile_f, be, x_item, out_item)
    vmem_limit = int(min(max(budget, est + (8 << 20)), int(cap * 0.9)))

    kernel = _make_scatter_kernel(tile_n, be, E, mask_tail, cdtype)

    out2 = pl.pallas_call(
        kernel,
        out_shape=jax.ShapeDtypeStruct((dim_size, F_work), out_dtype),
        grid_spec=pltpu.PrefetchScalarGridSpec(
            num_scalar_prefetch=2,            # lo (first block) / nb (block count)
            grid=grid,
            in_specs=[
                # lane-dense index row for this E block
                pl.BlockSpec((1, be),
                             lambda n, f, e, lo, nb: (0, _clamped_block(n, e, lo, nb))),
                # input slab for this E block / F tile
                pl.BlockSpec((be, tile_f),
                             lambda n, f, e, lo, nb: (_clamped_block(n, e, lo, nb), f)),
            ],
            # NOTE: pipeline_mode=pl.Buffered(1) here would free one resident
            # output block on v7x; left at the default (sweep if VMEM-bound).
            out_specs=pl.BlockSpec((tile_n, tile_f),
                                   lambda n, f, e, lo, nb: (n, f)),
            scratch_shapes=[pltpu.VMEM((tile_n, tile_f), jnp.float32)],
        ),
        compiler_params=pltpu.CompilerParams(
            # output tiles (n) and F tiles (f) are independent -> parallel
            # (megacore split); E blocks form the reduction -> last, arbitrary.
            dimension_semantics=("parallel", "parallel", "arbitrary"),
            vmem_limit_bytes=vmem_limit,
        ),
    )(lo_arr, nb_arr, idx_arr, x_arr)

    out = out2[:, :F].reshape(out_full_shape)
    out = jnp.moveaxis(out, 0, dim)
    if not is_float:
        # NOTE: integer inputs are accumulated in f32; exact only up to 2^24.
        out = jnp.rint(out).astype(orig_dtype)
    return out


class ScatterSumLayer:
    """JAX/Pallas mirror of the PyTorch ScatterSumLayer (no parameters)."""

    def __call__(self, inp, index, dim, dim_size):
        return scatter_sum_pallas(inp, index, dim=dim, dim_size=dim_size)


if __name__ == "__main__":
    key = jax.random.PRNGKey(0)
    ks = jax.random.split(key, 10)

    layer = ScatterSumLayer()

    # Case 1: classic GNN-style scatter along dim=0 (f32, dense path).
    E1, F1, N1 = 16, 32, 8
    x1 = jax.random.normal(ks[0], (E1, F1), dtype=jnp.float32)
    idx1 = jax.random.randint(ks[1], (E1,), 0, N1, dtype=jnp.int32)
    out1 = jax.block_until_ready(layer(x1, idx1, dim=0, dim_size=N1))
    ref1 = jnp.zeros((N1, F1), jnp.float32).at[idx1].add(x1)

    # Case 2: scatter along an interior dim (f32, dense path).
    B, S, D, N2 = 4, 16, 8, 8
    x2 = jax.random.normal(ks[2], (B, S, D), dtype=jnp.float32)
    idx2 = jax.random.randint(ks[3], (S,), 0, N2, dtype=jnp.int32)
    out2 = jax.block_until_ready(layer(x2, idx2, dim=1, dim_size=N2))
    ref2 = jnp.zeros((B, N2, D), jnp.float32).at[:, idx2, :].add(x2)

    # Case 3: native bf16 path, non-divisible E, bf16 output from the kernel.
    E3, F3, N3 = 22, 48, 6
    x3 = jax.random.normal(ks[4], (E3, F3), dtype=jnp.float32).astype(jnp.bfloat16)
    idx3 = jax.random.randint(ks[5], (E3,), 0, N3, dtype=jnp.int32)
    out3 = jax.block_until_ready(layer(x3, idx3, dim=0, dim_size=N3))
    ref3 = (jnp.zeros((N3, F3), jnp.float32)
            .at[idx3].add(x3.astype(jnp.float32))).astype(jnp.bfloat16)

    # Case 4: un-padded large-input path (in-kernel E-tail masking, partial E
    # block + partial F tile); small_x_bytes=0 forces it at test-friendly size.
    E4, F4, N4 = 300, 200, 64
    x4 = jax.random.normal(ks[6], (E4, F4), dtype=jnp.float32)
    idx4 = jax.random.randint(ks[7], (E4,), 0, N4, dtype=jnp.int32)
    out4 = jax.block_until_ready(
        scatter_sum_pallas(x4, idx4, dim=0, dim_size=N4, small_x_bytes=0))
    ref4 = jnp.zeros((N4, F4), jnp.float32).at[idx4].add(x4)

    # Case 5: dim_size-tiled sorted-index path (large dim_size), multiple E
    # blocks per output tile with block skipping (block_e=128 to force it).
    E5, F5, N5 = 257, 256, 2048
    x5 = jax.random.normal(ks[8], (E5, F5), dtype=jnp.float32)
    idx5 = jax.random.randint(ks[9], (E5,), 0, N5, dtype=jnp.int32)
    out5 = jax.block_until_ready(
        scatter_sum_pallas(x5, idx5, dim=0, dim_size=N5, block_e=128))
    ref5 = jnp.zeros((N5, F5), jnp.float32).at[idx5].add(x5)

    assert out1.shape == (N1, F1)
    assert out2.shape == (B, N2, D)
    assert out3.shape == (N3, F3) and out3.dtype == jnp.bfloat16
    assert out4.shape == (N4, F4)
    assert out5.shape == (N5, F5)

    np.testing.assert_allclose(np.asarray(out1), np.asarray(ref1),
                               rtol=1e-5, atol=1e-5)
    np.testing.assert_allclose(np.asarray(out2), np.asarray(ref2),
                               rtol=1e-5, atol=1e-5)
    np.testing.assert_allclose(np.asarray(out3, dtype=np.float32),
                               np.asarray(ref3, dtype=np.float32),
                               rtol=2e-2, atol=2e-2)
    np.testing.assert_allclose(np.asarray(out4), np.asarray(ref4),
                               rtol=1e-4, atol=1e-4)
    np.testing.assert_allclose(np.asarray(out5), np.asarray(ref5),
                               rtol=1e-4, atol=1e-4)

    print("KERNEL_OK")
</pallas_src>

<mosaic_0001>
module attributes {stable_mosaic.version = 11 : i64} {
  func.func @kernel(%arg0: i32, %arg1: i32, %arg2: i32, %arg3: memref<1xi32, #tpu.memory_space<smem>>, %arg4: memref<1xi32, #tpu.memory_space<smem>>, %arg5: memref<1x16xi32, #tpu.memory_space<vmem>>, %arg6: memref<16x128xf32, #tpu.memory_space<vmem>>, %arg7: memref<8x128xf32, #tpu.memory_space<vmem>>, %arg8: memref<8x128xf32, #tpu.memory_space<vmem>>) attributes {dimension_semantics = [#tpu.dimension_semantics<parallel>, #tpu.dimension_semantics<parallel>, #tpu.dimension_semantics<arbitrary>], iteration_bounds = array<i64: 1, 1, 1>, scalar_prefetch = 2 : i64, scratch_operands = 1 : i64, tpu.core_type = #tpu.core_type<tc>, window_params = [{transform_indices = @transform_0, window_bounds = array<i64: 1, 16>}, {transform_indices = @transform_1, window_bounds = array<i64: 16, 128>}, {transform_indices = @transform_2, window_bounds = array<i64: 8, 128>}]} {
    %c0_i32 = arith.constant 0 : i32
    %0 = arith.cmpi eq, %arg2, %c0_i32 : i32
    %1 = arith.extui %0 : i1 to i32
    %c0_i32_0 = arith.constant 0 : i32
    %2 = arith.cmpi ne, %1, %c0_i32_0 : i32
    scf.if %2 {
      %cst = arith.constant 0.000000e+00 : f32
      %11 = vector.broadcast %cst : f32 to vector<8x128xf32>
      %c0 = arith.constant 0 : index
      %c0_4 = arith.constant 0 : index
      %12 = vector.load %arg8[%c0, %c0_4] : memref<8x128xf32, #tpu.memory_space<vmem>>, vector<8x128xf32>
      tpu.vector_store %arg8[%c0, %c0_4], %11 {strides = array<i32>} : memref<8x128xf32, #tpu.memory_space<vmem>>, vector<8x128xf32>,
    } else {
    }
    %3 = arith.index_cast %arg0 : i32 to index
    %4 = memref.load %arg4[%3] : memref<1xi32, #tpu.memory_space<smem>>
    %5 = arith.cmpi slt, %arg2, %4 : i32
    %6 = arith.extui %5 : i1 to i32
    %c0_i32_1 = arith.constant 0 : i32
    %7 = arith.cmpi ne, %6, %c0_i32_1 : i32
    scf.if %7 {
      %c0 = arith.constant 0 : index
      %c0_4 = arith.constant 0 : index
      %11 = vector.load %arg5[%c0, %c0_4] : memref<1x16xi32, #tpu.memory_space<vmem>>, vector<1x16xi32>
      %c8_i32 = arith.constant 8 : i32
      %12 = arith.muli %arg0, %c8_i32 : i32
      %13 = vector.broadcast %12 : i32 to vector<1x16xi32>
      %14 = arith.subi %11, %13 : vector<1x16xi32>
      %15 = tpu.iota {dimensions = array<i32: 0>} : vector<8x16xi32>
      %16 = vector.broadcast %14 : vector<1x16xi32> to vector<8x16xi32>
      %17 = arith.cmpi eq, %16, %15 : vector<8x16xi32>
      %18 = arith.extui %17 : vector<8x16xi1> to vector<8x16xi32>
      %19 = arith.sitofp %18 : vector<8x16xi32> to vector<8x16xf32>
      %c0_5 = arith.constant 0 : index
      %c0_6 = arith.constant 0 : index
      %20 = vector.load %arg6[%c0_5, %c0_6] : memref<16x128xf32, #tpu.memory_space<vmem>>, vector<16x128xf32>
      %c0_7 = arith.constant 0 : index
      %c0_8 = arith.constant 0 : index
      %21 = vector.load %arg8[%c0_7, %c0_8] : memref<8x128xf32, #tpu.memory_space<vmem>>, vector<8x128xf32>
      %cst = arith.constant dense<0.000000e+00> : vector<8x128xf32>
      %22 = tpu.matmul %19, %20, %cst {dimension_numbers = #tpu.dot_dimension_numbers<[1], [0], [0], [1], [0, 0, 1, 1], [], []>} : vector<8x16xf32>, vector<16x128xf32>, vector<8x128xf32> -> vector<8x128xf32>
      %23 = arith.addf %21, %22 : vector<8x128xf32>
      %c0_9 = arith.constant 0 : index
      %c0_10 = arith.constant 0 : index
      %24 = vector.load %arg8[%c0_9, %c0_10] : memref<8x128xf32, #tpu.memory_space<vmem>>, vector<8x128xf32>
      tpu.vector_store %arg8[%c0_9, %c0_10], %23 {strides = array<i32>} : memref<8x128xf32, #tpu.memory_space<vmem>>, vector<8x128xf32>,
    } else {
    }
    %c0_i32_2 = arith.constant 0 : i32
    %8 = arith.cmpi eq, %arg2, %c0_i32_2 : i32
    %9 = arith.extui %8 : i1 to i32
    %c0_i32_3 = arith.constant 0 : i32
    %10 = arith.cmpi ne, %9, %c0_i32_3 : i32
    scf.if %10 {
      %c0 = arith.constant 0 : index
      %c0_4 = arith.constant 0 : index
      %11 = vector.load %arg8[%c0, %c0_4] : memref<8x128xf32, #tpu.memory_space<vmem>>, vector<8x128xf32>
      %c0_5 = arith.constant 0 : index
      %c0_6 = arith.constant 0 : index
      %12 = vector.load %arg7[%c0_5, %c0_6] : memref<8x128xf32, #tpu.memory_space<vmem>>, vector<8x128xf32>
      tpu.vector_store %arg7[%c0_5, %c0_6], %11 {strides = array<i32>} : memref<8x128xf32, #tpu.memory_space<vmem>>, vector<8x128xf32>,
    } else {
    }
    return
  }
  func.func @transform_0(%arg0: i32, %arg1: i32, %arg2: i32, %arg3: memref<1xi32, #tpu.memory_space<smem>>, %arg4: memref<1xi32, #tpu.memory_space<smem>>) -> (i32, i32) {
    %0 = arith.index_cast %arg0 : i32 to index
    %1 = memref.load %arg3[%0] : memref<1xi32, #tpu.memory_space<smem>>
    %2 = arith.index_cast %arg0 : i32 to index
    %3 = memref.load %arg4[%2] : memref<1xi32, #tpu.memory_space<smem>>
    %c1_i32 = arith.constant 1 : i32
    %4 = arith.subi %3, %c1_i32 : i32
    %c0_i32 = arith.constant 0 : i32
    %5 = arith.maxsi %4, %c0_i32 : i32
    %6 = arith.minsi %arg2, %5 : i32
    %7 = arith.addi %1, %6 : i32
    %c0_i32_0 = arith.constant 0 : i32
    %c0_i32_1 = arith.constant 0 : i32
    return %c0_i32_0, %7 : i32, i32
  }
  func.func @transform_1(%arg0: i32, %arg1: i32, %arg2: i32, %arg3: memref<1xi32, #tpu.memory_space<smem>>, %arg4: memref<1xi32, #tpu.memory_space<smem>>) -> (i32, i32) {
    %0 = arith.index_cast %arg0 : i32 to index
    %1 = memref.load %arg3[%0] : memref<1xi32, #tpu.memory_space<smem>>
    %2 = arith.index_cast %arg0 : i32 to index
    %3 = memref.load %arg4[%2] : memref<1xi32, #tpu.memory_space<smem>>
    %c1_i32 = arith.constant 1 : i32
    %4 = arith.subi %3, %c1_i32 : i32
    %c0_i32 = arith.constant 0 : i32
    %5 = arith.maxsi %4, %c0_i32 : i32
    %6 = arith.minsi %arg2, %5 : i32
    %7 = arith.addi %1, %6 : i32
    %c0_i32_0 = arith.constant 0 : i32
    return %7, %arg1 : i32, i32
  }
  func.func @transform_2(%arg0: i32, %arg1: i32, %arg2: i32, %arg3: memref<1xi32, #tpu.memory_space<smem>>, %arg4: memref<1xi32, #tpu.memory_space<smem>>) -> (i32, i32) {
    %c0_i32 = arith.constant 0 : i32
    return %arg0, %arg1 : i32, i32
  }
}

</mosaic_0001>

<llo_original>
// kernel: tpu_custom_call.1
$region0: #{tpu_custom_call.1}
  #allocation0 [shape = 'u32[]', space=smem, size = 0x4, offset = 0x4, fixed_abs, tag = 'smem constant byte address 0x4 - core index']
  #allocation1 [shape = 'u32[144,128]{1,0:T(1,128)}', space=vmem, size = 0x12000, scoped, tag = 'internal scratch']
  #allocation2 [shape = 'f32[8,128]{1,0:T(8,128)}', space=vmem, size = 0x1000, scoped, tag = 'scratch operand']
  #allocation3 [shape = 's32[1]{0}', space=sflag, size = 0x4, scoped, tag = 'scoped memory for tpu_custom_call.1']
  #allocation4 [shape = 's32[1]{0:T(128)S(6)}', space=smem, size = 0x200, scoped, tag = 'prefetched SMEM operand 0']
  #allocation5 [shape = 's32[1]{0:T(128)S(6)}', space=smem, size = 0x200, scoped, tag = 'prefetched SMEM operand 1']
  %s0 = inlined_call_operand.<no memory space> [shape: s32[1], index: 0, kind: input, shape index: {}]
  %s1 = inlined_call_operand.<no memory space> [shape: s32[1], index: 1, kind: input, shape index: {}]
  %s2 = inlined_call_operand.vmem [shape: s32[1,16], index: 2, kind: input, shape index: {}]
  %s3 = inlined_call_operand.hbm [shape: f32[16,128], index: 3, kind: input, shape index: {}]
  %s4 = inlined_call_operand.hbm [shape: f32[8,128], index: 4, kind: output, shape index: {}]
  %s5 = sld [smem:[#allocation0]]
  $region34: #{tpu_custom_call.1} parent=0
    _
  %s7 = ssub.s32 1, %s5
  %s8 = scalar_select 0, %s7, %s5
  %9 = sst [smem:[#allocation4]] %s0
  %10 = sst [smem:[#allocation5]] %s1
  $region1: #{tpu_custom_call.1} parent=0
    #allocation6 [shape = 'u8[8192]{0}', space=vmem, size = 0x2000, scoped, tag = 'input window, operand 3, single buffered']
    #allocation7 [shape = 's32[1]{0}', space=sflag, size = 0x4, scoped, tag = 'scoped memory for tpu_custom_call.1']
    #allocation8 [shape = 's32[1]{0}', space=sflag, size = 0x4, scoped, tag = 'scoped memory for tpu_custom_call.1']
    #allocation9 [shape = 'u8[4096]{0}', space=vmem, size = 0x1000, scoped, tag = 'output window, operand 0, single buffered']
    %11 = vsyncpa [#allocation7], 0
    %12 = vsyncpa [#allocation8], 0
    // Predicated region
    $region2: #{tpu_custom_call.1} parent=1 // pred_check
      _
    $region3: #{tpu_custom_call.1} parent=1 // pred_check_branch
      %14 = sbr.rel (0) target = $region5
    $region4: #{tpu_custom_call.1} parent=1 // pred_region
      %s15 = sld [smem:[#allocation4]]
      %s16 = sld [smem:[#allocation5]]
      %s17 = ssub.s32 %s16, 1
      %p18 = scmp.gt.s32.totalorder %s17, 0
      %s19 = scalar_select %p18, %s17, 0
      %p20 = scmp.lt.s32.totalorder 0, %s19
      %s21 = scalar_select %p20, 0, %s19
      %s22 = sadd.s32 %s15, %s21
      %p23 = scmp.lt.s32.totalorder %s22, 0
      %s24 = scalar_select %p23, %s22, 0
      %s25 = scalar_lea.vmem %s2, %s24
      %s26 = sld [smem:[#allocation4]]
      %s27 = sld [smem:[#allocation5]]
      %s28 = ssub.s32 %s27, 1
      %p29 = scmp.gt.s32.totalorder %s28, 0
      %s30 = scalar_select %p29, %s28, 0
      %p31 = scmp.lt.s32.totalorder 0, %s30
      %s32 = scalar_select %p31, 0, %s30
      %s33 = sadd.s32 %s26, %s32
    $region5: #{tpu_custom_call.1} parent=1 // pred_fallthru
      _
    // Predicated region
    $region6: #{tpu_custom_call.1} parent=1 // pred_check
      _
    $region7: #{tpu_custom_call.1} parent=1 // pred_check_branch
      %35 = sbr.rel (0) target = $region9
    $region8: #{tpu_custom_call.1} parent=1 // pred_region
      %s36 = sld [smem:[#allocation4]]
      %s37 = sld [smem:[#allocation5]]
      %s38 = ssub.s32 %s37, 1
      %p39 = scmp.gt.s32.totalorder %s38, 0
      %s40 = scalar_select %p39, %s38, 0
      %p41 = scmp.lt.s32.totalorder 0, %s40
      %s42 = scalar_select %p41, 0, %s40
      %s43 = sadd.s32 %s36, %s42
      %s44 = smul.u32 2, %s43
      %s46 = ssub.s32 256, 256
      %47 = vsyncadd [#allocation7], %s46
      %s48 = smul.addr %s44, 128
      %s49 = scalar_lea.hbm %s3, %s48
      %s50 = sshll.u32 [#allocation6], 4
      %s51 = int_to_ptr.vmem [resolvable:$true] %s50
      %56 = dma.hbm_to_vmem [thread:$0]  %s49, 256, %s51, [#allocation7], 128, 128, 8
    $region9: #{tpu_custom_call.1} parent=1 // pred_fallthru
      _
    // Predicated region
    $region10: #{tpu_custom_call.1} parent=1 // pred_check
      _
    $region11: #{tpu_custom_call.1} parent=1 // pred_check_branch
      %58 = sbr.rel (0) target = $region13
    $region12: #{tpu_custom_call.1} parent=1 // pred_region
      %59 = dma.done [#allocation7], 256
    $region13: #{tpu_custom_call.1} parent=1 // pred_fallthru
      _
    %s60 = sld [smem:[#allocation4]]
    %s61 = sld [smem:[#allocation5]]
    %s62 = ssub.s32 %s61, 1
    %p63 = scmp.gt.s32.totalorder %s62, 0
    %s64 = scalar_select %p63, %s62, 0
    %p65 = scmp.lt.s32.totalorder 0, %s64
    %s66 = scalar_select %p65, 0, %s64
    %s67 = sadd.s32 %s60, %s66
    %p68 = scmp.lt.s32.totalorder %s67, 0
    %s69 = scalar_select %p68, %s67, 0
    %s70 = scalar_lea.vmem %s2, %s69
    %s71 = sld [smem:[#allocation4]]
    %s72 = sld [smem:[#allocation5]]
    %s73 = ssub.s32 %s72, 1
    %p74 = scmp.gt.s32.totalorder %s73, 0
    %s75 = scalar_select %p74, %s73, 0
    %p76 = scmp.lt.s32.totalorder 0, %s75
    %s77 = scalar_select %p76, 0, %s75
    %s78 = sadd.s32 %s71, %s77
    %p79 = scmp.lt.s32.totalorder %s78, 0
    %s80 = scalar_select %p79, %s78, 0
    %s81 = scalar_lea.vmem %s2, %s80
    %s82 = sld [smem:[#allocation4]]
    %s83 = sld [smem:[#allocation5]]
    %s84 = ssub.s32 %s83, 1
    %p85 = scmp.gt.s32.totalorder %s84, 0
    %s86 = scalar_select %p85, %s84, 0
    %p87 = scmp.lt.s32.totalorder 0, %s86
    %s88 = scalar_select %p87, 0, %s86
    %s89 = sadd.s32 %s82, %s88
    %s90 = sld [smem:[#allocation4]]
    %s91 = sld [smem:[#allocation5]]
    %s92 = ssub.s32 %s91, 1
    %p93 = scmp.gt.s32.totalorder %s92, 0
    %s94 = scalar_select %p93, %s92, 0
    %p95 = scmp.lt.s32.totalorder 0, %s94
    %s96 = scalar_select %p95, 0, %s94
    %s97 = sadd.s32 %s90, %s96
    %s98 = smul.u32 2, %s97
    %p99 = scmp.eq.s32.totalorder 0, 0
    // Predicated region
    $region14: #{tpu_custom_call.1} parent=1 // pred_check
      %p100 = pneg %p99
    $region15: #{tpu_custom_call.1} parent=1 // pred_check_branch
      %102 = sbr.rel (%p100) target = $region17
    $region16: #{tpu_custom_call.1} parent=1 // pred_region
      %103 = vst [vmem:[#allocation2] sm:$0xff] 0.0
    $region17: #{tpu_custom_call.1} parent=1 // pred_fallthru
      _
    %s104 = sld [smem:[#allocation5]]
    %p105 = scmp.lt.s32.totalorder 0, %s104
    // Predicated region
    $region18: #{tpu_custom_call.1} parent=1 // pred_check
      %p106 = pneg %p105
    $region19: #{tpu_custom_call.1} parent=1 // pred_check_branch
      %108 = sbr.rel (%p106) target = $region21
    $region20: #{tpu_custom_call.1} parent=1 // pred_region
      %v109 = vld [vmem:[%s81] sm:$0x1]
      %s110 = smul.u32 0, 8
      %v111 = vstv %s110
      %v112 = vsub.s32 %v109, %v111
      %v113 = vlaneseq
      %v114 = vshrl.u32 %v113, 7
      %v115 = vlaneseq
      %v116 = vshrl.u32 %v115, 7
      %v117 = vsub.s32 0, %v116
      %v118 = vrot.slane %v112, %v117
      %vm119 = vcmp.eq.s32.totalorder %v118, %v114
      %v120 = vsel %vm119, 1, 0
      %v121 = vcvt.s32.f32 %v120
      %v122 = vld [vmem:[#allocation6] sm:$0xff]
      %v123 = vld [vmem:[#allocation6 + $0x8] sm:$0xff]
      %v124 = vld [vmem:[#allocation2] sm:$0xff]
      %vm125 = vcmask 130048
      %v127 = vsel %vm125, %v121, 0
      %129 = vmatprep.subr.mxu0 0.0
      %130 = vmatpush1.msra.mxu0 0.0
      %131 = vmatprep.subr.mxu0 0.0
      %132 = vmatpush1.msra.mxu0 0.0
      %133 = vmatprep.subr.mxu0 0.0
      %134 = vmatpush1.msra.mxu0 0.0
      %135 = vmatprep.subr.mxu0 0.0
      %136 = vmatpush1.msra.mxu0 0.0
      %137 = vmatprep.subr.mxu0 0.0
      %138 = vmatpush1.msra.mxu0 0.0
      %139 = vmatprep.subr.mxu0 0.0
      %140 = vmatpush1.msra.mxu0 0.0
      %141 = vmatprep.subr.mxu0 0.0
      %142 = vmatpush1.msra.mxu0 0.0
      %143 = vmatprep.subr.mxu0 0.0
      %144 = vmatpush1.msra.mxu0 0.0
      %145 = vmatprep.subr.mxu0 0.0
      %146 = vmatpush1.msra.mxu0 0.0
      %147 = vmatprep.subr.mxu0 0.0
      %148 = vmatpush1.msra.mxu0 0.0
      %149 = vmatprep.subr.mxu0 0.0
      %150 = vmatpush1.msra.mxu0 0.0
      %151 = vmatprep.subr.mxu0 0.0
      %152 = vmatpush1.msra.mxu0 0.0
      %153 = vmatprep.subr.mxu0 0.0
      %154 = vmatpush1.msra.mxu0 0.0
      %155 = vmatprep.subr.mxu0 0.0
      %156 = vmatpush1.msra.mxu0 0.0
      %157 = vmatprep.subr.mxu0 0.0
      %158 = vmatpush1.msra.mxu0 %v123
      %159 = vmatprep.subr.mxu0 0.0
      %160 = vmatpush1.msra.mxu0 %v122
      %161 = vmatprep.subr.mxu0 0.0
      %162 = vmatpush2.msra.mxu0 0.0
      %163 = vmatprep.subr.mxu0 0.0
      %164 = vmatpush2.msra.mxu0 0.0
      %165 = vmatprep.subr.mxu0 0.0
      %166 = vmatpush2.msra.mxu0 0.0
      %167 = vmatprep.subr.mxu0 0.0
      %168 = vmatpush2.msra.mxu0 0.0
      %169 = vmatprep.subr.mxu0 0.0
      %170 = vmatpush2.msra.mxu0 0.0
      %171 = vmatprep.subr.mxu0 0.0
      %172 = vmatpush2.msra.mxu0 0.0
      %173 = vmatprep.subr.mxu0 0.0
      %174 = vmatpush2.msra.mxu0 0.0
      %175 = vmatprep.subr.mxu0 0.0
      %176 = vmatpush2.msra.mxu0 0.0
      %177 = vmatprep.subr.mxu0 0.0
      %178 = vmatpush2.msra.mxu0 0.0
      %179 = vmatprep.subr.mxu0 0.0
      %180 = vmatpush2.msra.mxu0 0.0
      %181 = vmatprep.subr.mxu0 0.0
      %182 = vmatpush2.msra.mxu0 0.0
      %183 = vmatprep.subr.mxu0 0.0
      %184 = vmatpush2.msra.mxu0 0.0
      %185 = vmatprep.subr.mxu0 0.0
      %186 = vmatpush2.msra.mxu0 0.0
      %187 = vmatprep.subr.mxu0 0.0
      %188 = vmatpush2.msra.mxu0 0.0
      %189 = vmatprep.subr.mxu0 0.0
      %190 = vmatpush2.msra.mxu0 0.0
      %191 = vmatprep.subr.mxu0 0.0
      %192 = vmatpush2.msra.mxu0 0.0
      %193 = vmatprep.mubr.f32.mxu0 0.0
      %194 = vmatmul.mubr.f32.gmra.mxu0 %v127
      %v195 = vpop.f32.mrf.mxu0
      %v196 = vadd.f32 0.0, %v195
      %v197 = vpop.f32.mrf.mxu0
      %198 = vdwg.mxu0
      %v199 = vadd.f32 %v124, %v196
      %200 = vst [vmem:[#allocation2] sm:$0xff] %v199
    $region21: #{tpu_custom_call.1} parent=1 // pred_fallthru
      _
    // Predicated region
    $region22: #{tpu_custom_call.1} parent=1 // pred_check
      %p201 = pneg %p99
    $region23: #{tpu_custom_call.1} parent=1 // pred_check_branch
      %203 = sbr.rel (%p201) target = $region25
    $region24: #{tpu_custom_call.1} parent=1 // pred_region
      %v204 = vld [vmem:[#allocation2] sm:$0xff]
      %205 = vst [vmem:[#allocation9] sm:$0xff] %v204
    $region25: #{tpu_custom_call.1} parent=1 // pred_fallthru
      _
    // Predicated region
    $region26: #{tpu_custom_call.1} parent=1 // pred_check
      _
    $region27: #{tpu_custom_call.1} parent=1 // pred_check_branch
      %207 = sbr.rel (0) target = $region29
    $region28: #{tpu_custom_call.1} parent=1 // pred_region
      %s209 = ssub.s32 128, 128
      %210 = vsyncadd [#allocation8], %s209
      %s212 = sshll.u32 [#allocation9], 4
      %s213 = int_to_ptr.vmem [resolvable:$true] %s212
      %215 = dma.vmem_to_hbm [thread:$0]  %s213, 128, %s4, [#allocation8]
    $region29: #{tpu_custom_call.1} parent=1 // pred_fallthru
      _
    // Predicated region
    $region30: #{tpu_custom_call.1} parent=1 // pred_check
      _
    $region31: #{tpu_custom_call.1} parent=1 // pred_check_branch
      %217 = sbr.rel (0) target = $region33
    $region32: #{tpu_custom_call.1} parent=1 // pred_region
      %218 = dma.done [#allocation8], 128
    $region33: #{tpu_custom_call.1} parent=1 // pred_fallthru
      _
    %219 = vsyncpa [#allocation7], 1
    %220 = vsyncpa [#allocation8], 1

</llo_original>
